<compile_context>
chip_gen: v7x
topology: tpu7x:2x2x1
jax: 0.10.0
libtpu: 0.0.40
codegen_flags: <defaults>
</compile_context>

<pallas_src>
import functools

import jax
import jax.numpy as jnp
from jax import lax
from jax.experimental import pallas as pl
from jax.experimental.pallas import tpu as pltpu

LANE = 128


def _round_up(x, m):
    return (x + m - 1) // m * m


def _device_kind():
    try:
        return jax.devices()[0].device_kind.lower()
    except Exception:
        return ""


def _same_pad_conv_kernel(x_ref, w_ref, b_ref, o_ref, *, kernel_size, dilation,
                          tile_l, fuse_taps):
    # x_ref: (win, Cin_p)        input window (conv zero-pad already applied)
    # w_ref: (K*Cin_p, Cout_p)   if fuse_taps else (K, Cin_p, Cout_p)
    # b_ref: (1, Cout_p)         bias, f32
    # o_ref: (tl, Cout_p)        one output tile
    win = x_ref[...]                                    # one aligned whole-block load
    if kernel_size == 1:
        w0 = w_ref[...] if fuse_taps else w_ref[0]
        acc = jnp.dot(win[:tile_l, :], w0, preferred_element_type=jnp.float32)
    elif fuse_taps:
        # im2col slab (tl, K*Cin_p) from K STATIC slices of the loaded window, then a
        # single deep MXU contraction (fills v6e's 256-deep MXU).
        taps = [win[k * dilation:k * dilation + tile_l, :] for k in range(kernel_size)]
        slab = jnp.concatenate(taps, axis=-1)
        acc = jnp.dot(slab, w_ref[...], preferred_element_type=jnp.float32)
    else:
        # Per-tap matmuls accumulated in f32: no slab copy / extra VMEM store pass
        # (preferred on v5e's single vst slot and v7x's MRB accumulation).
        acc = jnp.dot(win[:tile_l, :], w_ref[0], preferred_element_type=jnp.float32)
        for k in range(1, kernel_size):
            off = k * dilation
            acc = acc + jnp.dot(win[off:off + tile_l, :], w_ref[k],
                                preferred_element_type=jnp.float32)
    o_ref[...] = (acc + b_ref[...]).astype(o_ref.dtype)


def same_pad_conv(x, weight, bias, *, dilation=1, tile_l=None, compute_dtype=None,
                  out_dtype=None, fuse_taps=None):
    """SamePadConv forward (groups=1).
    x: (N, Cin, L)  weight: (Cout, Cin, K)  bias: (Cout,)  -> (N, Cout, L)."""
    N, Cin, L = x.shape
    Cout, _, K = weight.shape
    receptive_field = (K - 1) * dilation + 1
    padding = receptive_field // 2
    halo = (K - 1) * dilation

    if compute_dtype is None:
        compute_dtype = x.dtype          # exact parity by default; bf16 is opt-in
    if out_dtype is None:
        out_dtype = x.dtype

    kind = _device_kind()
    if fuse_taps is None:
        # Fused contraction helps v6e's 256-deep MXU; per-tap accumulate avoids the
        # slab copy on v5e/v7x.
        fuse_taps = "v6" in kind

    sub = 16 if compute_dtype == jnp.bfloat16 else 8    # native sublane tile
    cin_p = _round_up(Cin, LANE)                         # lane-dense MXU LHS
    cout_p = _round_up(Cout, LANE)                       # lane-dense (unmasked) stores

    if tile_l is None:
        tile_l = 2048 if "v6" in kind else 1024
        # Keep >= ~8 L-tiles per sequence when L allows (pipeline depth; lets the
        # v7x megacore shard the L axis even at batch=1).
        tile_l = min(tile_l, pl.cdiv(L, 8))
    tl = max(sub, _round_up(min(tile_l, L), sub))
    num_tiles = pl.cdiv(L, tl)
    l_out_p = num_tiles * tl
    halo_p = _round_up(halo, sub) if halo else 0
    win = tl + halo_p
    lp = l_out_p + halo_p                                # padded input length

    # NCL -> NLC (channels on lanes).  Cast to compute dtype BEFORE the transpose/pad
    # pass (halves its HBM bytes when bf16), fold conv zero-pad + tile slack + channel
    # padding into one pad, then materialize the overlapping halo windows so the
    # kernel only ever sees (win, Cin_p) blocks.
    xc = x if x.dtype == compute_dtype else x.astype(compute_dtype)
    x_nlc = jnp.transpose(xc, (0, 2, 1))
    x_pad = jnp.pad(x_nlc, ((0, 0), (padding, lp - padding - L), (0, cin_p - Cin)))
    if num_tiles == 1:
        x_win = x_pad[:, None]                           # (N, 1, win, cin_p)
    else:
        x_win = jnp.stack(
            [x_pad[:, j * tl:j * tl + win, :] for j in range(num_tiles)], axis=1)
    # TODO(synk): pl.Element halo-window index maps (or a manual double-buffered DMA)
    # would read x directly and drop this wrapper transpose/pad/window pass entirely.

    # (Cout, Cin, K) -> (K, Cin_p, Cout_p); the fused variant flattens taps into the
    # contraction dim.
    w3 = jnp.transpose(weight, (2, 1, 0))
    w3 = jnp.pad(w3, ((0, 0), (0, cin_p - Cin), (0, cout_p - Cout))).astype(compute_dtype)
    if fuse_taps:
        w_arg = w3.reshape(K * cin_p, cout_p)
        w_spec = pl.BlockSpec((K * cin_p, cout_p), lambda n, j: (0, 0))
    else:
        w_arg = w3
        w_spec = pl.BlockSpec((K, cin_p, cout_p), lambda n, j: (0, 0, 0))
    b2 = jnp.pad(bias, (0, cout_p - Cout)).astype(jnp.float32).reshape(1, cout_p)

    kernel = functools.partial(_same_pad_conv_kernel, kernel_size=K,
                               dilation=dilation, tile_l=tl, fuse_taps=fuse_taps)

    # Windowed tiles keep VMEM O(tile); 48 MiB stays under v7x's 64 MiB physical,
    # 96 MiB exploits v5e/v6e's 128 MiB.
    vmem_limit = (96 if ("v5" in kind or "v6" in kind) else 48) * 1024 * 1024

    out_nlc = pl.pallas_call(
        kernel,
        out_shape=jax.ShapeDtypeStruct((N, l_out_p, cout_p), out_dtype),
        grid=(N, num_tiles),
        in_specs=[
            # One halo window per (batch, L-tile): small, fully pipelined, no
            # whole-sequence residency and no batch-boundary DMA bubble.
            pl.BlockSpec((None, None, win, cin_p), lambda n, j: (n, j, 0, 0)),
            # Grid-invariant weight & bias: fetched once.
            w_spec,
            pl.BlockSpec((1, cout_p), lambda n, j: (0, 0)),
        ],
        out_specs=pl.BlockSpec((None, tl, cout_p), lambda n, j: (n, j, 0)),
        compiler_params=pltpu.CompilerParams(
            dimension_semantics=("parallel", "parallel"),
            vmem_limit_bytes=vmem_limit,
        ),
    )(x_win, w_arg, b2)

    # Drop channel/length padding, back to NCL.
    # TODO(synk): a bf16 ts2vec stack should keep activations NLC + 128-channel-padded
    # end-to-end so this slice/transpose (a full-activation HBM pass) disappears.
    return jnp.transpose(out_nlc[:, :L, :Cout], (0, 2, 1))


def _reference(x, weight, bias, *, dilation):
    """Pure-JAX reference matching torch.nn.Conv1d + trailing trim."""
    K = weight.shape[-1]
    receptive_field = (K - 1) * dilation + 1
    padding = receptive_field // 2
    out = lax.conv_general_dilated(
        x, weight,
        window_strides=(1,),
        padding=[(padding, padding)],
        rhs_dilation=(dilation,),
        dimension_numbers=("NCH", "OIH", "NCH"),
    ) + bias[None, :, None]
    if receptive_field % 2 == 0:
        out = out[:, :, :-1]
    return out


def _make_params(key, cin, cout, k):
    kw, kb = jax.random.split(key)
    bound = 1.0 / (cin * k) ** 0.5
    weight = jax.random.uniform(kw, (cout, cin, k), jnp.float32, -bound, bound)
    bias = jax.random.uniform(kb, (cout,), jnp.float32, -bound, bound)
    return weight, bias


if __name__ == "__main__":
    key = jax.random.PRNGKey(0)
    k0, k1, k2, k3 = jax.random.split(key, 4)

    # Case 1: even receptive field (exercises the trailing trim); both tap strategies.
    N, Cin, Cout, L, K, dil = 2, 4, 8, 16, 4, 1
    x = jax.random.normal(k0, (N, Cin, L), dtype=jnp.float32)
    w, b = _make_params(k1, Cin, Cout, K)
    ref = _reference(x, w, b, dilation=dil)
    for fuse in (False, True):
        out = jax.block_until_ready(same_pad_conv(x, w, b, dilation=dil, fuse_taps=fuse))
        assert out.shape == ref.shape == (N, Cout, L), (out.shape, ref.shape)
        assert jnp.allclose(out, ref, atol=1e-5, rtol=1e-5), f"f32 mismatch (fuse={fuse})"
    # Opt-in bf16 MXU path, looser tolerance.
    out_bf16 = jax.block_until_ready(
        same_pad_conv(x, w, b, dilation=dil, compute_dtype=jnp.bfloat16))
    assert out_bf16.shape == ref.shape
    assert jnp.allclose(out_bf16, ref, atol=5e-2, rtol=5e-2), "bf16 mismatch"

    # Case 2: odd receptive field, dilation=2, odd channel counts, multiple L tiles
    # (exercises the overlapping halo windows); both tap strategies.
    N, Cin, Cout, L, K, dil = 2, 3, 5, 40, 3, 2
    x = jax.random.normal(k2, (N, Cin, L), dtype=jnp.float32)
    w, b = _make_params(k3, Cin, Cout, K)
    ref = _reference(x, w, b, dilation=dil)
    for fuse in (False, True):
        out = jax.block_until_ready(
            same_pad_conv(x, w, b, dilation=dil, tile_l=16, fuse_taps=fuse))
        assert out.shape == ref.shape == (N, Cout, L), (out.shape, ref.shape)
        assert jnp.allclose(out, ref, atol=1e-5, rtol=1e-5), f"tiled f32 mismatch (fuse={fuse})"
    # bf16 multi-tile path (16-aligned sublanes) emitting bf16 activations.
    out = jax.block_until_ready(
        same_pad_conv(x, w, b, dilation=dil, tile_l=16,
                      compute_dtype=jnp.bfloat16, out_dtype=jnp.bfloat16))
    assert out.shape == ref.shape
    assert jnp.allclose(out.astype(jnp.float32), ref, atol=5e-2, rtol=5e-2), "bf16 tiled mismatch"

    print("KERNEL_OK")
</pallas_src>

<mosaic_0001>
module attributes {stable_mosaic.version = 11 : i64} {
  func.func @_same_pad_conv_kernel(%arg0: i32, %arg1: i32, %arg2: memref<1x1x16x128xf32, #tpu.memory_space<vmem>>, %arg3: memref<4x128x128xf32, #tpu.memory_space<vmem>>, %arg4: memref<1x128xf32, #tpu.memory_space<vmem>>, %arg5: memref<1x8x128xf32, #tpu.memory_space<vmem>>) attributes {dimension_semantics = [#tpu.dimension_semantics<parallel>, #tpu.dimension_semantics<parallel>], iteration_bounds = array<i64: 2, 2>, scalar_prefetch = 0 : i64, scratch_operands = 0 : i64, tpu.core_type = #tpu.core_type<tc>, window_params = [{transform_indices = @transform_0, window_bounds = array<i64: 1, 1, 16, 128>}, {pipeline_mode = #tpu.pipeline_mode<synchronous>, transform_indices = @transform_1, window_bounds = array<i64: 4, 128, 128>}, {pipeline_mode = #tpu.pipeline_mode<synchronous>, transform_indices = @transform_2, window_bounds = array<i64: 1, 128>}, {transform_indices = @transform_3, window_bounds = array<i64: 1, 8, 128>}]} {
    %c0 = arith.constant 0 : index
    %c0_0 = arith.constant 0 : index
    %c0_1 = arith.constant 0 : index
    %c0_2 = arith.constant 0 : index
    %0 = vector.load %arg2[%c0, %c0_0, %c0_1, %c0_2] : memref<1x1x16x128xf32, #tpu.memory_space<vmem>>, vector<1x1x16x128xf32>
    %1 = vector.shape_cast %0 : vector<1x1x16x128xf32> to vector<16x128xf32>
    %2 = vector.extract_strided_slice %1 {offsets = [0, 0], sizes = [8, 128], strides = [1, 1]} : vector<16x128xf32> to vector<8x128xf32>
    %c0_3 = arith.constant 0 : index
    %c0_4 = arith.constant 0 : index
    %c0_5 = arith.constant 0 : index
    %3 = vector.load %arg3[%c0_3, %c0_4, %c0_5] : memref<4x128x128xf32, #tpu.memory_space<vmem>>, vector<1x128x128xf32>
    %4 = vector.shape_cast %3 : vector<1x128x128xf32> to vector<128x128xf32>
    %cst = arith.constant dense<0.000000e+00> : vector<8x128xf32>
    %5 = tpu.matmul %2, %4, %cst {dimension_numbers = #tpu.dot_dimension_numbers<[1], [0], [0], [1], [0, 0, 1, 1], [], []>} : vector<8x128xf32>, vector<128x128xf32>, vector<8x128xf32> -> vector<8x128xf32>
    %6 = vector.extract_strided_slice %1 {offsets = [1, 0], sizes = [8, 128], strides = [1, 1]} : vector<16x128xf32> to vector<8x128xf32>
    %c1 = arith.constant 1 : index
    %c0_6 = arith.constant 0 : index
    %c0_7 = arith.constant 0 : index
    %7 = vector.load %arg3[%c1, %c0_6, %c0_7] : memref<4x128x128xf32, #tpu.memory_space<vmem>>, vector<1x128x128xf32>
    %8 = vector.shape_cast %7 : vector<1x128x128xf32> to vector<128x128xf32>
    %cst_8 = arith.constant dense<0.000000e+00> : vector<8x128xf32>
    %9 = tpu.matmul %6, %8, %cst_8 {dimension_numbers = #tpu.dot_dimension_numbers<[1], [0], [0], [1], [0, 0, 1, 1], [], []>} : vector<8x128xf32>, vector<128x128xf32>, vector<8x128xf32> -> vector<8x128xf32>
    %10 = arith.addf %5, %9 : vector<8x128xf32>
    %11 = vector.extract_strided_slice %1 {offsets = [2, 0], sizes = [8, 128], strides = [1, 1]} : vector<16x128xf32> to vector<8x128xf32>
    %c2 = arith.constant 2 : index
    %c0_9 = arith.constant 0 : index
    %c0_10 = arith.constant 0 : index
    %12 = vector.load %arg3[%c2, %c0_9, %c0_10] : memref<4x128x128xf32, #tpu.memory_space<vmem>>, vector<1x128x128xf32>
    %13 = vector.shape_cast %12 : vector<1x128x128xf32> to vector<128x128xf32>
    %cst_11 = arith.constant dense<0.000000e+00> : vector<8x128xf32>
    %14 = tpu.matmul %11, %13, %cst_11 {dimension_numbers = #tpu.dot_dimension_numbers<[1], [0], [0], [1], [0, 0, 1, 1], [], []>} : vector<8x128xf32>, vector<128x128xf32>, vector<8x128xf32> -> vector<8x128xf32>
    %15 = arith.addf %10, %14 : vector<8x128xf32>
    %16 = vector.extract_strided_slice %1 {offsets = [3, 0], sizes = [8, 128], strides = [1, 1]} : vector<16x128xf32> to vector<8x128xf32>
    %c3 = arith.constant 3 : index
    %c0_12 = arith.constant 0 : index
    %c0_13 = arith.constant 0 : index
    %17 = vector.load %arg3[%c3, %c0_12, %c0_13] : memref<4x128x128xf32, #tpu.memory_space<vmem>>, vector<1x128x128xf32>
    %18 = vector.shape_cast %17 : vector<1x128x128xf32> to vector<128x128xf32>
    %cst_14 = arith.constant dense<0.000000e+00> : vector<8x128xf32>
    %19 = tpu.matmul %16, %18, %cst_14 {dimension_numbers = #tpu.dot_dimension_numbers<[1], [0], [0], [1], [0, 0, 1, 1], [], []>} : vector<8x128xf32>, vector<128x128xf32>, vector<8x128xf32> -> vector<8x128xf32>
    %20 = arith.addf %15, %19 : vector<8x128xf32>
    %c0_15 = arith.constant 0 : index
    %c0_16 = arith.constant 0 : index
    %21 = vector.load %arg4[%c0_15, %c0_16] : memref<1x128xf32, #tpu.memory_space<vmem>>, vector<1x128xf32>
    %22 = vector.broadcast %21 : vector<1x128xf32> to vector<8x128xf32>
    %23 = arith.addf %20, %22 : vector<8x128xf32>
    %c0_17 = arith.constant 0 : index
    %c0_18 = arith.constant 0 : index
    %c0_19 = arith.constant 0 : index
    %24 = vector.load %arg5[%c0_17, %c0_18, %c0_19] : memref<1x8x128xf32, #tpu.memory_space<vmem>>, vector<1x8x128xf32>
    %25 = vector.shape_cast %24 : vector<1x8x128xf32> to vector<8x128xf32>
    %26 = vector.shape_cast %23 : vector<8x128xf32> to vector<1x8x128xf32>
    tpu.vector_store %arg5[%c0_17, %c0_18, %c0_19], %26 {strides = array<i32>} : memref<1x8x128xf32, #tpu.memory_space<vmem>>, vector<1x8x128xf32>,
    return
  }
  func.func @transform_0(%arg0: i32, %arg1: i32) -> (i32, i32, i32, i32) {
    %c0_i32 = arith.constant 0 : i32
    %c0_i32_0 = arith.constant 0 : i32
    %c0_i32_1 = arith.constant 0 : i32
    return %arg0, %arg1, %c0_i32, %c0_i32_0 : i32, i32, i32, i32
  }
  func.func @transform_1(%arg0: i32, %arg1: i32) -> (i32, i32, i32) {
    %c0_i32 = arith.constant 0 : i32
    %c0_i32_0 = arith.constant 0 : i32
    %c0_i32_1 = arith.constant 0 : i32
    %c0_i32_2 = arith.constant 0 : i32
    return %c0_i32, %c0_i32_0, %c0_i32_1 : i32, i32, i32
  }
  func.func @transform_2(%arg0: i32, %arg1: i32) -> (i32, i32) {
    %c0_i32 = arith.constant 0 : i32
    %c0_i32_0 = arith.constant 0 : i32
    %c0_i32_1 = arith.constant 0 : i32
    return %c0_i32, %c0_i32_0 : i32, i32
  }
  func.func @transform_3(%arg0: i32, %arg1: i32) -> (i32, i32, i32) {
    %c0_i32 = arith.constant 0 : i32
    %c0_i32_0 = arith.constant 0 : i32
    return %arg0, %arg1, %c0_i32 : i32, i32, i32
  }
}

</mosaic_0001>

<llo_original>
// kernel: tpu_custom_call.1
$region0: #{tpu_custom_call.1}
  #allocation0 [shape = 'u32[]', space=smem, size = 0x4, offset = 0x4, fixed_abs, tag = 'smem constant byte address 0x4 - core index']
  #allocation1 [shape = 'u32[144,128]{1,0:T(1,128)}', space=vmem, size = 0x12000, scoped, tag = 'internal scratch']
  %s0 = inlined_call_operand.hbm [shape: f32[2,2,16,128], index: 0, kind: input, shape index: {}]
  %s1 = inlined_call_operand.hbm [shape: f32[4,128,128], index: 1, kind: input, shape index: {}]
  %s2 = inlined_call_operand.vmem [shape: f32[1,128], index: 2, kind: input, shape index: {}]
  %s3 = inlined_call_operand.hbm [shape: f32[2,16,128], index: 3, kind: output, shape index: {}]
  %s4 = sld [smem:[#allocation0]]
  $region53: #{tpu_custom_call.1} parent=0
    _
  %s6 = ssub.s32 1, %s4
  %s7 = scalar_select 0, %s6, %s4
  $region1: #{tpu_custom_call.1} parent=0
    #allocation2 [shape = 'u8[16384]{0}', space=vmem, size = 0x4000, scoped, tag = 'input window, operand 0']
    #allocation3 [shape = 's32[2]{0}', space=sflag, size = 0x8, scoped, tag = 'scoped memory for tpu_custom_call.1']
    #allocation4 [shape = 's32[2]{0}', space=sflag, size = 0x8, scoped, tag = 'scoped memory for tpu_custom_call.1']
    #allocation5 [shape = 'u8[262144]{0}', space=vmem, size = 0x40000, scoped, tag = 'input window, operand 1, single buffered']
    #allocation6 [shape = 's32[1]{0}', space=sflag, size = 0x4, scoped, tag = 'scoped memory for tpu_custom_call.1']
    #allocation7 [shape = 'u8[8192]{0}', space=vmem, size = 0x2000, scoped, tag = 'output window, operand 0']
    %8 = vsyncpa [#allocation3], 0
    %s9 = scalar_lea.sflag [#allocation3], 1
    %10 = vsyncpa %s9, 0
    %11 = vsyncpa [#allocation6], 0
    %12 = vsyncpa [#allocation4], 0
    %s13 = scalar_lea.sflag [#allocation4], 1
    %14 = vsyncpa %s13, 0
    loop: start=0, step=1, limit=6
    $region2: #{tpu_custom_call.1} parent=1 // loop_pre_header
      _
    $region3: #{tpu_custom_call.1} parent=1 // loop_header
      %s16 = sphi 0, %s20
      %p17 = scmp.ge.s32.totalorder %s16, 6
      %s23 = sphi 0, %s35
      %s24 = sphi 0, %s31
      %s25 = sphi 0, %s23
      %s26 = sphi 0, %s24
      %s27 = sphi 0, %s25
      %s28 = sphi 0, %s26
      %s40 = sphi 0, %s42
      %s43 = sphi 0, %s40
      %s44 = sphi 0, %s43
      %s60 = sphi 0, %s44
      %s64 = sphi 0, %s64
      %s66 = sphi 0, %s64
      %s67 = sphi 0, %s66
      %s81 = sphi 0, %s67
      %s85 = sphi 0, %s85
      %s87 = sphi 0, %s85
      %s88 = sphi 0, %s87
      %s102 = sphi 0, %s88
      %s110 = sphi 0, %s112
      %s113 = sphi 0, %s110
      %s114 = sphi 0, %s113
      %s130 = sphi 0, %s114
    $region4: #{tpu_custom_call.1} parent=1 // loop_header_branch
      %19 = sbr.rel (%p17) target = $region8
    $region5: #{tpu_custom_call.1} parent=1 // loop_body
      %s21 = ssub.s32 %s16, 1
      %s22 = ssub.s32 %s16, 2
      %s29 = sadd.s32 1, %s24
      %p30 = scmp.ge.s32.totalorder %s29, 2
      %s31 = scalar_select %p30, 0, %s29
      %s32 = sadd.s32 1, %s23
      %s33 = scalar_select %p30, %s32, %s23
      %p34 = scmp.ge.s32.totalorder %s33, 2
      %s35 = scalar_select %p34, 0, %s33
      %s36 = ssub.s32 %s23, %s35
      %s37 = ssub.s32 %s24, %s31
      %s38 = sor.u32 %s36, %s37
      %p39 = scmp.eq.s32.totalorder %s38, 0
      %s41 = sadd.s32 %s40, 1
      %s42 = scalar_select %p39, %s40, %s41
      %p45 = pneg %p39
      %p46 = scmp.eq.s32.totalorder %s16, 3
      %p47 = por %p45, %p46
      %p48 = scmp.ne.s32.totalorder %s40, %s43
      %p49 = scmp.eq.s32.totalorder %s16, 0
      %p50 = por %p48, %p49
      %p51 = scmp.ne.s32.totalorder %s40, %s43
      %p52 = scmp.eq.s32.totalorder %s21, 3
      %p53 = por %p51, %p52
      %p54 = scmp.ne.s32.totalorder %s43, %s44
      %p55 = scmp.eq.s32.totalorder %s21, 0
      %p56 = por %p54, %p55
      %p57 = scmp.ne.s32.totalorder %s43, %s44
      %p58 = scmp.eq.s32.totalorder %s22, 3
      %p59 = por %p57, %p58
      %p61 = scmp.ne.s32.totalorder %s44, %s60
      %p62 = scmp.eq.s32.totalorder %s22, 0
      %p63 = por %p61, %p62
      %s65 = sadd.s32 %s64, 1
      %p68 = scmp.eq.s32.totalorder %s16, 3
      %p69 = scmp.ne.s32.totalorder %s64, %s66
      %p70 = scmp.eq.s32.totalorder %s16, 0
      %p71 = por %p69, %p70
      %p72 = scmp.ne.s32.totalorder %s64, %s66
      %p73 = scmp.eq.s32.totalorder %s21, 3
      %p74 = por %p72, %p73
      %p75 = scmp.ne.s32.totalorder %s66, %s67
      %p76 = scmp.eq.s32.totalorder %s21, 0
      %p77 = por %p75, %p76
      %p78 = scmp.ne.s32.totalorder %s66, %s67
      %p79 = scmp.eq.s32.totalorder %s22, 3
      %p80 = por %p78, %p79
      %p82 = scmp.ne.s32.totalorder %s67, %s81
      %p83 = scmp.eq.s32.totalorder %s22, 0
      %p84 = por %p82, %p83
      %s86 = sadd.s32 %s85, 1
      %p89 = scmp.eq.s32.totalorder %s16, 3
      %p90 = scmp.ne.s32.totalorder %s85, %s87
      %p91 = scmp.eq.s32.totalorder %s16, 0
      %p92 = por %p90, %p91
      %p93 = scmp.ne.s32.totalorder %s85, %s87
      %p94 = scmp.eq.s32.totalorder %s21, 3
      %p95 = por %p93, %p94
      %p96 = scmp.ne.s32.totalorder %s87, %s88
      %p97 = scmp.eq.s32.totalorder %s21, 0
      %p98 = por %p96, %p97
      %p99 = scmp.ne.s32.totalorder %s87, %s88
      %p100 = scmp.eq.s32.totalorder %s22, 3
      %p101 = por %p99, %p100
      %p103 = scmp.ne.s32.totalorder %s88, %s102
      %p104 = scmp.eq.s32.totalorder %s22, 0
      %p105 = por %p103, %p104
      %s106 = ssub.s32 %s23, %s35
      %s107 = ssub.s32 %s24, %s31
      %s108 = sor.u32 %s106, %s107
      %p109 = scmp.eq.s32.totalorder %s108, 0
      %s111 = sadd.s32 %s110, 1
      %s112 = scalar_select %p109, %s110, %s111
      %p115 = pneg %p109
      %p116 = scmp.eq.s32.totalorder %s16, 3
      %p117 = por %p115, %p116
      %p118 = scmp.ne.s32.totalorder %s110, %s113
      %p119 = scmp.eq.s32.totalorder %s16, 0
      %p120 = por %p118, %p119
      %p121 = scmp.ne.s32.totalorder %s110, %s113
      %p122 = scmp.eq.s32.totalorder %s21, 3
      %p123 = por %p121, %p122
      %p124 = scmp.ne.s32.totalorder %s113, %s114
      %p125 = scmp.eq.s32.totalorder %s21, 0
      %p126 = por %p124, %p125
      %p127 = scmp.ne.s32.totalorder %s113, %s114
      %p128 = scmp.eq.s32.totalorder %s22, 3
      %p129 = por %p127, %p128
      %p131 = scmp.ne.s32.totalorder %s114, %s130
      %p132 = scmp.eq.s32.totalorder %s22, 0
      %p133 = por %p131, %p132
      %p134 = scmp.le.s32.totalorder 1, %s16
      %p135 = scmp.lt.s32.totalorder %s16, 5
      %p136 = pnand %p134, %p135
      %p137 = pneg %p136
      // Predicated region
      $region9: #{tpu_custom_call.1} parent=5 // pred_check
        _
      $region10: #{tpu_custom_call.1} parent=5 // pred_check_branch
        %139 = sbr.rel (%p136) target = $region12
      $region11: #{tpu_custom_call.1} parent=5 // pred_region
        %s140 = ssub.s32 %s16, 1
        // Predicated region
        $region13: #{tpu_custom_call.1} parent=11 // pred_check
          %p141 = pneg %p77
        $region14: #{tpu_custom_call.1} parent=11 // pred_check_branch
          %143 = sbr.rel (%p141) target = $region16
        $region15: #{tpu_custom_call.1} parent=11 // pred_region
          %s145 = ssub.s32 8192, 8192
          %146 = vsyncadd [#allocation6], %s145
          %s147 = sshll.u32 [#allocation5], 4
          %s148 = int_to_ptr.vmem [resolvable:$true] %s147
          %153 = dma.hbm_to_vmem [thread:$0]  %s1, 8192, %s148, [#allocation6], 128, 128, 8
        $region16: #{tpu_custom_call.1} parent=11 // pred_fallthru
          _
        // Predicated region
        $region17: #{tpu_custom_call.1} parent=11 // pred_check
          %p154 = pneg %p98
        $region18: #{tpu_custom_call.1} parent=11 // pred_check_branch
          %156 = sbr.rel (%p154) target = $region20
        $region19: #{tpu_custom_call.1} parent=11 // pred_region
          _
        $region20: #{tpu_custom_call.1} parent=11 // pred_fallthru
          _
      $region12: #{tpu_custom_call.1} parent=5 // pred_fallthru
        _
      %p157 = scmp.lt.s32.totalorder %s16, 4
      // Predicated region
      $region21: #{tpu_custom_call.1} parent=5 // pred_check
        %p158 = pneg %p157
      $region22: #{tpu_custom_call.1} parent=5 // pred_check_branch
        %160 = sbr.rel (%p158) target = $region24
      $region23: #{tpu_custom_call.1} parent=5 // pred_region
        // Predicated region
        $region25: #{tpu_custom_call.1} parent=23 // pred_check
          %p161 = pneg %p50
        $region26: #{tpu_custom_call.1} parent=23 // pred_check_branch
          %163 = sbr.rel (%p161) target = $region28
        $region27: #{tpu_custom_call.1} parent=23 // pred_region
          %s164 = sand.u32 %s40, 1
          %s165 = scalar_lea.sflag [#allocation3], %s164
          %s166 = sand.u32 %s40, 1
          %s167 = smul.addr %s166, 16
          %s168 = scalar_lea.vmem [#allocation2], %s167
          %s170 = ssub.s32 256, 256
          %171 = vsyncadd %s165, %s170
          %s172 = smul.addr %s24, 2
          %s173 = smul.addr %s23, 4
          %s174 = sadd.s32 %s172, %s173
          %s175 = smul.addr %s174, 128
          %s176 = scalar_lea.hbm %s0, %s175
          %s177 = sshll.u32 %s168, 4
          %s178 = int_to_ptr.vmem [resolvable:$true] %s177
          %183 = dma.hbm_to_vmem [thread:$0]  %s176, 256, %s178, %s165, 128, 128, 8
        $region28: #{tpu_custom_call.1} parent=23 // pred_fallthru
          _
      $region24: #{tpu_custom_call.1} parent=5 // pred_fallthru
        _
      %p184 = scmp.le.s32.totalorder 1, %s16
      %p185 = scmp.lt.s32.totalorder %s16, 5
      %p186 = pnand %p184, %p185
      %p187 = pneg %p186
      // Predicated region
      $region29: #{tpu_custom_call.1} parent=5 // pred_check
        _
      $region30: #{tpu_custom_call.1} parent=5 // pred_check_branch
        %189 = sbr.rel (%p186) target = $region32
      $region31: #{tpu_custom_call.1} parent=5 // pred_region
        %s190 = ssub.s32 %s16, 1
        %s191 = sand.u32 %s43, 1
        %s192 = scalar_lea.sflag [#allocation3], %s191
        %s193 = sand.u32 %s43, 1
        %s194 = smul.addr %s193, 16
        %s195 = scalar_lea.vmem [#allocation2], %s194
        // Predicated region
        $region33: #{tpu_custom_call.1} parent=31 // pred_check
          %p196 = pneg %p56
        $region34: #{tpu_custom_call.1} parent=31 // pred_check_branch
          %198 = sbr.rel (%p196) target = $region36
        $region35: #{tpu_custom_call.1} parent=31 // pred_region
          %199 = dma.done %s192, 256
        $region36: #{tpu_custom_call.1} parent=31 // pred_fallthru
          _
        // Predicated region
        $region37: #{tpu_custom_call.1} parent=31 // pred_check
          %p200 = pneg %p77
        $region38: #{tpu_custom_call.1} parent=31 // pred_check_branch
          %202 = sbr.rel (%p200) target = $region40
        $region39: #{tpu_custom_call.1} parent=31 // pred_region
          %203 = dma.done [#allocation6], 8192
        $region40: #{tpu_custom_call.1} parent=31 // pred_fallthru
          _
        %s204 = sand.u32 %s43, 1
        %s205 = scalar_lea.sflag [#allocation3], %s204
        %s206 = sand.u32 %s43, 1
        %s207 = smul.addr %s206, 16
        %s208 = scalar_lea.vmem [#allocation2], %s207
        %p209 = pneg %p56
        %p210 = pneg %p53
        %p211 = pneg %p77
        %p212 = pneg %p74
        %p213 = pneg %p98
        %p214 = pneg %p95
        %p215 = pneg %p126
        %p216 = pneg %p123
        %s217 = sand.u32 %s113, 1
        %s218 = scalar_lea.sflag [#allocation4], %s217
        %s219 = sand.u32 %s113, 1
        %s220 = smul.addr %s219, 8
        %s221 = scalar_lea.vmem [#allocation7], %s220
        %v222 = vld [vmem:[%s195] sm:$0xff]
        %v223 = vld [vmem:[%s195 + $0x8] sm:$0xff]
        %v224 = vld [vmem:[#allocation5] sm:$0xff]
        %v225 = vld [vmem:[#allocation5 + $0x8] sm:$0xff]
        %v226 = vld [vmem:[#allocation5 + $0x10] sm:$0xff]
        %v227 = vld [vmem:[#allocation5 + $0x18] sm:$0xff]
        %v228 = vld [vmem:[#allocation5 + $0x20] sm:$0xff]
        %v229 = vld [vmem:[#allocation5 + $0x28] sm:$0xff]
        %v230 = vld [vmem:[#allocation5 + $0x30] sm:$0xff]
        %v231 = vld [vmem:[#allocation5 + $0x38] sm:$0xff]
        %v232 = vld [vmem:[#allocation5 + $0x40] sm:$0xff]
        %v233 = vld [vmem:[#allocation5 + $0x48] sm:$0xff]
        %v234 = vld [vmem:[#allocation5 + $0x50] sm:$0xff]
        %v235 = vld [vmem:[#allocation5 + $0x58] sm:$0xff]
        %v236 = vld [vmem:[#allocation5 + $0x60] sm:$0xff]
        %v237 = vld [vmem:[#allocation5 + $0x68] sm:$0xff]
        %v238 = vld [vmem:[#allocation5 + $0x70] sm:$0xff]
        %v239 = vld [vmem:[#allocation5 + $0x78] sm:$0xff]
        %s240 = scalar_lea.vmem [#allocation5], 128
        %v241 = vld [vmem:[%s240] sm:$0xff]
        %v242 = vld [vmem:[%s240 + $0x8] sm:$0xff]
        %v243 = vld [vmem:[%s240 + $0x10] sm:$0xff]
        %v244 = vld [vmem:[%s240 + $0x18] sm:$0xff]
        %v245 = vld [vmem:[%s240 + $0x20] sm:$0xff]
        %v246 = vld [vmem:[%s240 + $0x28] sm:$0xff]
        %v247 = vld [vmem:[%s240 + $0x30] sm:$0xff]
        %v248 = vld [vmem:[%s240 + $0x38] sm:$0xff]
        %v249 = vld [vmem:[%s240 + $0x40] sm:$0xff]
        %v250 = vld [vmem:[%s240 + $0x48] sm:$0xff]
        %v251 = vld [vmem:[%s240 + $0x50] sm:$0xff]
        %v252 = vld [vmem:[%s240 + $0x58] sm:$0xff]
        %v253 = vld [vmem:[%s240 + $0x60] sm:$0xff]
        %v254 = vld [vmem:[%s240 + $0x68] sm:$0xff]
        %v255 = vld [vmem:[%s240 + $0x70] sm:$0xff]
        %v256 = vld [vmem:[%s240 + $0x78] sm:$0xff]
        %vm259 = vcmask 1046528
        %v260 = vrot.slane %v222, 1
        %v261 = vrot.slane %v223, 1
        %v262 = vsel %vm259, %v260, %v261
        %264 = vmatprep.subr.mxu0 0.0
        %265 = vmatpush1.msra.mxu0 %v241
        %266 = vmatprep.subr.mxu0 0.0
        %267 = vmatpush1.msra.mxu0 %v242
        %268 = vmatprep.subr.mxu0 0.0
        %269 = vmatpush1.msra.mxu0 %v243
        %270 = vmatprep.subr.mxu0 0.0
        %271 = vmatpush1.msra.mxu0 %v244
        %272 = vmatprep.subr.mxu0 0.0
        %273 = vmatpush1.msra.mxu0 %v245
        %274 = vmatprep.subr.mxu0 0.0
        %275 = vmatpush1.msra.mxu0 %v246
        %276 = vmatprep.subr.mxu0 0.0
        %277 = vmatpush1.msra.mxu0 %v247
        %278 = vmatprep.subr.mxu0 0.0
        %279 = vmatpush1.msra.mxu0 %v248
        %280 = vmatprep.subr.mxu0 0.0
        %281 = vmatpush1.msra.mxu0 %v249
        %282 = vmatprep.subr.mxu0 0.0
        %283 = vmatpush1.msra.mxu0 %v250
        %284 = vmatprep.subr.mxu0 0.0
        %285 = vmatpush1.msra.mxu0 %v251
        %286 = vmatprep.subr.mxu0 0.0
        %287 = vmatpush1.msra.mxu0 %v252
        %288 = vmatprep.subr.mxu0 0.0
        %289 = vmatpush1.msra.mxu0 %v253
        %290 = vmatprep.subr.mxu0 0.0
        %291 = vmatpush1.msra.mxu0 %v254
        %292 = vmatprep.subr.mxu0 0.0
        %293 = vmatpush1.msra.mxu0 %v255
        %294 = vmatprep.subr.mxu0 0.0
        %295 = vmatpush1.msra.mxu0 %v256
        %296 = vmatprep.subr.mxu0 0.0
        %297 = vmatpush1.msra.mxu0 0.0
        %298 = vmatprep.subr.mxu0 0.0
        %299 = vmatpush1.msra.mxu0 0.0
        %300 = vmatprep.subr.mxu0 0.0
        %301 = vmatpush1.msra.mxu0 0.0
        %302 = vmatprep.subr.mxu0 0.0
        %303 = vmatpush1.msra.mxu0 0.0
        %304 = vmatprep.subr.mxu0 0.0
        %305 = vmatpush1.msra.mxu0 0.0
        %306 = vmatprep.subr.mxu0 0.0
        %307 = vmatpush1.msra.mxu0 0.0
        %308 = vmatprep.subr.mxu0 0.0
        %309 = vmatpush1.msra.mxu0 0.0
        %310 = vmatprep.subr.mxu0 0.0
        %311 = vmatpush1.msra.mxu0 0.0
        %312 = vmatprep.subr.mxu0 0.0
        %313 = vmatpush1.msra.mxu0 0.0
        %314 = vmatprep.subr.mxu0 0.0
        %315 = vmatpush1.msra.mxu0 0.0
        %316 = vmatprep.subr.mxu0 0.0
        %317 = vmatpush1.msra.mxu0 0.0
        %318 = vmatprep.subr.mxu0 0.0
        %319 = vmatpush1.msra.mxu0 0.0
        %320 = vmatprep.subr.mxu0 0.0
        %321 = vmatpush1.msra.mxu0 0.0
        %322 = vmatprep.subr.mxu0 0.0
        %323 = vmatpush1.msra.mxu0 0.0
        %324 = vmatprep.subr.mxu0 0.0
        %325 = vmatpush1.msra.mxu0 0.0
        %326 = vmatprep.subr.mxu0 0.0
        %327 = vmatpush1.msra.mxu0 0.0
        %328 = vmatprep.mubr.f32.mxu0 0.0
        %329 = vmatmul.mubr.f32.gmra.mrb[0].mxu0 %v262
        %v330 = vpop.f32.mrb[0].mxu0
        %v331 = vadd.f32 0.0, %v330
        %v332 = vpop.f32.mrb[0].mxu0
        %333 = vdwg.mxu0
        %334 = vmatprep.subr.mxu0 0.0
        %335 = vmatpush1.msra.mxu0 %v224
        %336 = vmatprep.subr.mxu0 0.0
        %337 = vmatpush1.msra.mxu0 %v225
        %338 = vmatprep.subr.mxu0 0.0
        %339 = vmatpush1.msra.mxu0 %v226
        %340 = vmatprep.subr.mxu0 0.0
        %341 = vmatpush1.msra.mxu0 %v227
        %342 = vmatprep.subr.mxu0 0.0
        %343 = vmatpush1.msra.mxu0 %v228
        %344 = vmatprep.subr.mxu0 0.0
        %345 = vmatpush1.msra.mxu0 %v229
        %346 = vmatprep.subr.mxu0 0.0
        %347 = vmatpush1.msra.mxu0 %v230
        %348 = vmatprep.subr.mxu0 0.0
        %349 = vmatpush1.msra.mxu0 %v231
        %350 = vmatprep.subr.mxu0 0.0
        %351 = vmatpush1.msra.mxu0 %v232
        %352 = vmatprep.subr.mxu0 0.0
        %353 = vmatpush1.msra.mxu0 %v233
        %354 = vmatprep.subr.mxu0 0.0
        %355 = vmatpush1.msra.mxu0 %v234
        %356 = vmatprep.subr.mxu0 0.0
        %357 = vmatpush1.msra.mxu0 %v235
        %358 = vmatprep.subr.mxu0 0.0
        %359 = vmatpush1.msra.mxu0 %v236
        %360 = vmatprep.subr.mxu0 0.0
        %361 = vmatpush1.msra.mxu0 %v237
        %362 = vmatprep.subr.mxu0 0.0
        %363 = vmatpush1.msra.mxu0 %v238
        %364 = vmatprep.subr.mxu0 0.0
        %365 = vmatpush1.msra.mxu0 %v239
        %366 = vmatprep.subr.mxu0 0.0
        %367 = vmatpush1.msra.mxu0 0.0
        %368 = vmatprep.subr.mxu0 0.0
        %369 = vmatpush1.msra.mxu0 0.0
        %370 = vmatprep.subr.mxu0 0.0
        %371 = vmatpush1.msra.mxu0 0.0
        %372 = vmatprep.subr.mxu0 0.0
        %373 = vmatpush1.msra.mxu0 0.0
        %374 = vmatprep.subr.mxu0 0.0
        %375 = vmatpush1.msra.mxu0 0.0
        %376 = vmatprep.subr.mxu0 0.0
        %377 = vmatpush1.msra.mxu0 0.0
        %378 = vmatprep.subr.mxu0 0.0
        %379 = vmatpush1.msra.mxu0 0.0
        %380 = vmatprep.subr.mxu0 0.0
        %381 = vmatpush1.msra.mxu0 0.0
        %382 = vmatprep.subr.mxu0 0.0
        %383 = vmatpush1.msra.mxu0 0.0
        %384 = vmatprep.subr.mxu0 0.0
        %385 = vmatpush1.msra.mxu0 0.0
        %386 = vmatprep.subr.mxu0 0.0
        %387 = vmatpush1.msra.mxu0 0.0
        %388 = vmatprep.subr.mxu0 0.0
        %389 = vmatpush1.msra.mxu0 0.0
        %390 = vmatprep.subr.mxu0 0.0
        %391 = vmatpush1.msra.mxu0 0.0
        %392 = vmatprep.subr.mxu0 0.0
        %393 = vmatpush1.msra.mxu0 0.0
        %394 = vmatprep.subr.mxu0 0.0
        %395 = vmatpush1.msra.mxu0 0.0
        %396 = vmatprep.subr.mxu0 0.0
        %397 = vmatpush1.msra.mxu0 0.0
        %398 = vmatprep.mubr.f32.mxu0 0.0
        %399 = vmatmul.mubr.f32.gmra.mrb[0].mxu0 %v222
        %v400 = vpop.f32.mrb[0].mxu0
        %v401 = vadd.f32 %v331, %v400
        %v402 = vpop.f32.mrb[0].mxu0
        %403 = vdwg.mxu0
        %s404 = scalar_lea.vmem [#allocation5], 256
        %v405 = vld [vmem:[%s404] sm:$0xff]
        %v406 = vld [vmem:[%s404 + $0x8] sm:$0xff]
        %v407 = vld [vmem:[%s404 + $0x10] sm:$0xff]
        %v408 = vld [vmem:[%s404 + $0x18] sm:$0xff]
        %v409 = vld [vmem:[%s404 + $0x20] sm:$0xff]
        %v410 = vld [vmem:[%s404 + $0x28] sm:$0xff]
        %v411 = vld [vmem:[%s404 + $0x30] sm:$0xff]
        %v412 = vld [vmem:[%s404 + $0x38] sm:$0xff]
        %v413 = vld [vmem:[%s404 + $0x40] sm:$0xff]
        %v414 = vld [vmem:[%s404 + $0x48] sm:$0xff]
        %v415 = vld [vmem:[%s404 + $0x50] sm:$0xff]
        %v416 = vld [vmem:[%s404 + $0x58] sm:$0xff]
        %v417 = vld [vmem:[%s404 + $0x60] sm:$0xff]
        %v418 = vld [vmem:[%s404 + $0x68] sm:$0xff]
        %v419 = vld [vmem:[%s404 + $0x70] sm:$0xff]
        %v420 = vld [vmem:[%s404 + $0x78] sm:$0xff]
        %vm421 = vcmask 1045504
        %v422 = vrot.slane %v222, 2
        %v423 = vrot.slane %v223, 2
        %v424 = vsel %vm421, %v422, %v423
        %426 = vmatprep.subr.mxu0 0.0
        %427 = vmatpush1.msra.mxu0 %v405
        %428 = vmatprep.subr.mxu0 0.0
        %429 = vmatpush1.msra.mxu0 %v406
        %430 = vmatprep.subr.mxu0 0.0
        %431 = vmatpush1.msra.mxu0 %v407
        %432 = vmatprep.subr.mxu0 0.0
        %433 = vmatpush1.msra.mxu0 %v408
        %434 = vmatprep.subr.mxu0 0.0
        %435 = vmatpush1.msra.mxu0 %v409
        %436 = vmatprep.subr.mxu0 0.0
        %437 = vmatpush1.msra.mxu0 %v410
        %438 = vmatprep.subr.mxu0 0.0
        %439 = vmatpush1.msra.mxu0 %v411
        %440 = vmatprep.subr.mxu0 0.0
        %441 = vmatpush1.msra.mxu0 %v412
        %442 = vmatprep.subr.mxu0 0.0
        %443 = vmatpush1.msra.mxu0 %v413
        %444 = vmatprep.subr.mxu0 0.0
        %445 = vmatpush1.msra.mxu0 %v414
        %446 = vmatprep.subr.mxu0 0.0
        %447 = vmatpush1.msra.mxu0 %v415
        %448 = vmatprep.subr.mxu0 0.0
        %449 = vmatpush1.msra.mxu0 %v416
        %450 = vmatprep.subr.mxu0 0.0
        %451 = vmatpush1.msra.mxu0 %v417
        %452 = vmatprep.subr.mxu0 0.0
        %453 = vmatpush1.msra.mxu0 %v418
        %454 = vmatprep.subr.mxu0 0.0
        %455 = vmatpush1.msra.mxu0 %v419
        %456 = vmatprep.subr.mxu0 0.0
        %457 = vmatpush1.msra.mxu0 %v420
        %458 = vmatprep.subr.mxu0 0.0
        %459 = vmatpush1.msra.mxu0 0.0
        %460 = vmatprep.subr.mxu0 0.0
        %461 = vmatpush1.msra.mxu0 0.0
        %462 = vmatprep.subr.mxu0 0.0
        %463 = vmatpush1.msra.mxu0 0.0
        %464 = vmatprep.subr.mxu0 0.0
        %465 = vmatpush1.msra.mxu0 0.0
        %466 = vmatprep.subr.mxu0 0.0
        %467 = vmatpush1.msra.mxu0 0.0
        %468 = vmatprep.subr.mxu0 0.0
        %469 = vmatpush1.msra.mxu0 0.0
        %470 = vmatprep.subr.mxu0 0.0
        %471 = vmatpush1.msra.mxu0 0.0
        %472 = vmatprep.subr.mxu0 0.0
        %473 = vmatpush1.msra.mxu0 0.0
        %474 = vmatprep.subr.mxu0 0.0
        %475 = vmatpush1.msra.mxu0 0.0
        %476 = vmatprep.subr.mxu0 0.0
        %477 = vmatpush1.msra.mxu0 0.0
        %478 = vmatprep.subr.mxu0 0.0
        %479 = vmatpush1.msra.mxu0 0.0
        %480 = vmatprep.subr.mxu0 0.0
        %481 = vmatpush1.msra.mxu0 0.0
        %482 = vmatprep.subr.mxu0 0.0
        %483 = vmatpush1.msra.mxu0 0.0
        %484 = vmatprep.subr.mxu0 0.0
        %485 = vmatpush1.msra.mxu0 0.0
        %486 = vmatprep.subr.mxu0 0.0
        %487 = vmatpush1.msra.mxu0 0.0
        %488 = vmatprep.subr.mxu0 0.0
        %489 = vmatpush1.msra.mxu0 0.0
        %490 = vmatprep.mubr.f32.mxu0 0.0
        %491 = vmatmul.mubr.f32.gmra.mrb[0].mxu0 %v424
        %v492 = vpop.f32.mrb[0].mxu0
        %v493 = vadd.f32 0.0, %v492
        %v494 = vpop.f32.mrb[0].mxu0
        %495 = vdwg.mxu0
        %v496 = vadd.f32 %v401, %v493
        %s497 = scalar_lea.vmem [#allocation5], 384
        %v498 = vld [vmem:[%s497] sm:$0xff]
        %v499 = vld [vmem:[%s497 + $0x8] sm:$0xff]
        %v500 = vld [vmem:[%s497 + $0x10] sm:$0xff]
        %v501 = vld [vmem:[%s497 + $0x18] sm:$0xff]
        %v502 = vld [vmem:[%s497 + $0x20] sm:$0xff]
        %v503 = vld [vmem:[%s497 + $0x28] sm:$0xff]
        %v504 = vld [vmem:[%s497 + $0x30] sm:$0xff]
        %v505 = vld [vmem:[%s497 + $0x38] sm:$0xff]
        %v506 = vld [vmem:[%s497 + $0x40] sm:$0xff]
        %v507 = vld [vmem:[%s497 + $0x48] sm:$0xff]
        %v508 = vld [vmem:[%s497 + $0x50] sm:$0xff]
        %v509 = vld [vmem:[%s497 + $0x58] sm:$0xff]
        %v510 = vld [vmem:[%s497 + $0x60] sm:$0xff]
        %v511 = vld [vmem:[%s497 + $0x68] sm:$0xff]
        %v512 = vld [vmem:[%s497 + $0x70] sm:$0xff]
        %v513 = vld [vmem:[%s497 + $0x78] sm:$0xff]
        %vm514 = vcmask 1044480
        %v515 = vrot.slane %v222, 3
        %v516 = vrot.slane %v223, 3
        %v517 = vsel %vm514, %v515, %v516
        %519 = vmatprep.subr.mxu0 0.0
        %520 = vmatpush1.msra.mxu0 %v498
        %521 = vmatprep.subr.mxu0 0.0
        %522 = vmatpush1.msra.mxu0 %v499
        %523 = vmatprep.subr.mxu0 0.0
        %524 = vmatpush1.msra.mxu0 %v500
        %525 = vmatprep.subr.mxu0 0.0
        %526 = vmatpush1.msra.mxu0 %v501
        %527 = vmatprep.subr.mxu0 0.0
        %528 = vmatpush1.msra.mxu0 %v502
        %529 = vmatprep.subr.mxu0 0.0
        %530 = vmatpush1.msra.mxu0 %v503
        %531 = vmatprep.subr.mxu0 0.0
        %532 = vmatpush1.msra.mxu0 %v504
        %533 = vmatprep.subr.mxu0 0.0
        %534 = vmatpush1.msra.mxu0 %v505
        %535 = vmatprep.subr.mxu0 0.0
        %536 = vmatpush1.msra.mxu0 %v506
        %537 = vmatprep.subr.mxu0 0.0
        %538 = vmatpush1.msra.mxu0 %v507
        %539 = vmatprep.subr.mxu0 0.0
        %540 = vmatpush1.msra.mxu0 %v508
        %541 = vmatprep.subr.mxu0 0.0
        %542 = vmatpush1.msra.mxu0 %v509
        %543 = vmatprep.subr.mxu0 0.0
        %544 = vmatpush1.msra.mxu0 %v510
        %545 = vmatprep.subr.mxu0 0.0
        %546 = vmatpush1.msra.mxu0 %v511
        %547 = vmatprep.subr.mxu0 0.0
        %548 = vmatpush1.msra.mxu0 %v512
        %549 = vmatprep.subr.mxu0 0.0
        %550 = vmatpush1.msra.mxu0 %v513
        %551 = vmatprep.subr.mxu0 0.0
        %552 = vmatpush1.msra.mxu0 0.0
        %553 = vmatprep.subr.mxu0 0.0
        %554 = vmatpush1.msra.mxu0 0.0
        %555 = vmatprep.subr.mxu0 0.0
        %556 = vmatpush1.msra.mxu0 0.0
        %557 = vmatprep.subr.mxu0 0.0
        %558 = vmatpush1.msra.mxu0 0.0
        %559 = vmatprep.subr.mxu0 0.0
        %560 = vmatpush1.msra.mxu0 0.0
        %561 = vmatprep.subr.mxu0 0.0
        %562 = vmatpush1.msra.mxu0 0.0
        %563 = vmatprep.subr.mxu0 0.0
        %564 = vmatpush1.msra.mxu0 0.0
        %565 = vmatprep.subr.mxu0 0.0
        %566 = vmatpush1.msra.mxu0 0.0
        %567 = vmatprep.subr.mxu0 0.0
        %568 = vmatpush1.msra.mxu0 0.0
        %569 = vmatprep.subr.mxu0 0.0
        %570 = vmatpush1.msra.mxu0 0.0
        %571 = vmatprep.subr.mxu0 0.0
        %572 = vmatpush1.msra.mxu0 0.0
        %573 = vmatprep.subr.mxu0 0.0
        %574 = vmatpush1.msra.mxu0 0.0
        %575 = vmatprep.subr.mxu0 0.0
        %576 = vmatpush1.msra.mxu0 0.0
        %577 = vmatprep.subr.mxu0 0.0
        %578 = vmatpush1.msra.mxu0 0.0
        %579 = vmatprep.subr.mxu0 0.0
        %580 = vmatpush1.msra.mxu0 0.0
        %581 = vmatprep.subr.mxu0 0.0
        %582 = vmatpush1.msra.mxu0 0.0
        %583 = vmatprep.mubr.f32.mxu0 0.0
        %584 = vmatmul.mubr.f32.gmra.mrb[0].mxu0 %v517
        %v585 = vpop.f32.mrb[0].mxu0
        %v586 = vadd.f32 0.0, %v585
        %v587 = vpop.f32.mrb[0].mxu0
        %588 = vdwg.mxu0
        %v589 = vadd.f32 %v496, %v586
        %v590 = vld [vmem:[%s2] sm:$0x1]
        %v592 = vlaneseq
        %v593 = vshrl.u32 %v592, 7
        %v594 = vsub.s32 0, %v593
        %v595 = vrot.slane %v590, %v594
        %v597 = vadd.f32 %v589, %v595
        %598 = vst [vmem:[%s221] sm:$0xff] %v597
        %s599 = sand.u32 %s113, 1
        %s600 = scalar_lea.sflag [#allocation4], %s599
        %s601 = sand.u32 %s113, 1
        %s602 = smul.addr %s601, 8
        %s603 = scalar_lea.vmem [#allocation7], %s602
        // Predicated region
        $region41: #{tpu_custom_call.1} parent=31 // pred_check
          %p604 = pneg %p123
        $region42: #{tpu_custom_call.1} parent=31 // pred_check_branch
          %606 = sbr.rel (%p604) target = $region44
        $region43: #{tpu_custom_call.1} parent=31 // pred_region
          %s608 = ssub.s32 128, 128
          %609 = vsyncadd %s600, %s608
          %s610 = smul.addr %s25, 2
          %s611 = sadd.s32 %s26, %s610
          %s612 = smul.addr %s611, 128
          %s613 = scalar_lea.hbm %s3, %s612
          %s615 = sshll.u32 %s603, 4
          %s616 = int_to_ptr.vmem [resolvable:$true] %s615
          %618 = dma.vmem_to_hbm [thread:$0]  %s616, 128, %s613, %s600
        $region44: #{tpu_custom_call.1} parent=31 // pred_fallthru
          _
      $region32: #{tpu_custom_call.1} parent=5 // pred_fallthru
        _
      %p619 = scmp.le.s32.totalorder 2, %s16
      // Predicated region
      $region45: #{tpu_custom_call.1} parent=5 // pred_check
        %p620 = pneg %p619
      $region46: #{tpu_custom_call.1} parent=5 // pred_check_branch
        %622 = sbr.rel (%p620) target = $region48
      $region47: #{tpu_custom_call.1} parent=5 // pred_region
        %s623 = ssub.s32 %s16, 2
        // Predicated region
        $region49: #{tpu_custom_call.1} parent=47 // pred_check
          %p624 = pneg %p129
        $region50: #{tpu_custom_call.1} parent=47 // pred_check_branch
          %626 = sbr.rel (%p624) target = $region52
        $region51: #{tpu_custom_call.1} parent=47 // pred_region
          %s627 = sand.u32 %s114, 1
          %s628 = scalar_lea.sflag [#allocation4], %s627
          %s629 = sand.u32 %s114, 1
          %s630 = smul.addr %s629, 8
          %s631 = scalar_lea.vmem [#allocation7], %s630
          %632 = dma.done %s628, 128
        $region52: #{tpu_custom_call.1} parent=47 // pred_fallthru
          _
      $region48: #{tpu_custom_call.1} parent=5 // pred_fallthru
        _
    $region6: #{tpu_custom_call.1} parent=1 // loop_footer
      %s20 = sadd.s32 1, %s16
    $region7: #{tpu_custom_call.1} parent=1 // loop_footer_branch
      %15 = sbr.rel target = $region3
    $region8: #{tpu_custom_call.1} parent=1 // loop_exit
      _
    %633 = vsyncpa [#allocation3], 1
    %s634 = scalar_lea.sflag [#allocation3], 1
    %635 = vsyncpa %s634, 1
    %636 = vsyncpa [#allocation6], 1
    %637 = vsyncpa [#allocation4], 1
    %s638 = scalar_lea.sflag [#allocation4], 1
    %639 = vsyncpa %s638, 1

</llo_original>
